<compile_context>
chip_gen: v7x
topology: tpu7x:2x2x1
jax: 0.10.0
libtpu: 0.0.40
codegen_flags: <defaults>
</compile_context>

<pallas_src>
import functools

import jax
import jax.numpy as jnp
from jax.experimental import pallas as pl
from jax.experimental.pallas import tpu as pltpu

LANES = 128        # vreg lane width
MAX_ROWS = 2048    # rows per block: 2048*128*4B = 1 MiB per input block


def _build_dice_sums(block_rows: int, nb_total: int, n_cores: int):
    """pallas_call producing per-core elementwise partial sums.

    Output shape (n_cores*2, block_rows, LANES):
      row [2c+0] accumulates sigmoid(x)*t, row [2c+1] accumulates sigmoid(x)+t  for core c.
    """
    nb_inner = nb_total // n_cores

    def kernel(x_ref, t_ref, acc_ref):
        i = pl.program_id(1)   # inner ("arbitrary") block axis

        @pl.when(i == 0)
        def _():
            acc_ref[...] = jnp.zeros_like(acc_ref)

        # Cast to f32 inside VMEM (free for f32 inputs); mandatory on v5e (no bf16 VPU/EUP).
        x = x_ref[...].astype(jnp.float32)
        t = t_ref[...].astype(jnp.float32)
        p = jax.nn.sigmoid(x)          # EUP slot, hidden under the DMA-bound path

        # Pure VPU elementwise accumulation -- no XLU reductions in the hot loop.
        acc_ref[0] += p * t            # intersection partials
        acc_ref[1] += p + t            # denominator partials (sum_p + sum_t)

    return pl.pallas_call(
        kernel,
        out_shape=jax.ShapeDtypeStruct((n_cores * 2, block_rows, LANES), jnp.float32),
        grid=(n_cores, nb_inner),
        in_specs=[
            pl.BlockSpec((block_rows, LANES), lambda c, i: (c * nb_inner + i, 0)),
            pl.BlockSpec((block_rows, LANES), lambda c, i: (c * nb_inner + i, 0)),
        ],
        # Per-core output block, revisited (resident accumulator) across the inner axis.
        out_specs=pl.BlockSpec((2, block_rows, LANES), lambda c, i: (c, 0, 0)),
        compiler_params=pltpu.CompilerParams(
            dimension_semantics=("parallel", "arbitrary"),
        ),
    )


@functools.partial(jax.jit, static_argnames=("smooth",))
def dice_loss(inputs, targets, smooth: float = 1.0):
    """Matches torch DiceLoss.forward(inputs, targets, smooth)."""
    n = inputs.size
    # Native dtypes, no wrapper-side upcast or padding (no extra HBM pass).
    x = inputs.reshape(-1)
    t = targets.reshape(-1)

    rows_total = n // LANES
    if rows_total >= 8:
        # Balanced block sizing: as large as possible (<= MAX_ROWS) while keeping blocks
        # roughly equal, so the ragged JAX tail is only a few rows.
        nb = pl.cdiv(rows_total, MAX_ROWS)
        if nb >= 2 and nb % 2 == 1:
            nb += 1                                  # favor an even block count (megacore)
        block_rows = max(8, (rows_total // nb // 8) * 8)
        nb_total = rows_total // block_rows
        # 2-way megacore split only when it is exact (no OOB blocks); no-op on 1-TC chips.
        n_cores = 2 if (nb_total >= 2 and nb_total % 2 == 0) else 1
        rows_main = nb_total * block_rows
        n_main = rows_main * LANES

        x2 = x[:n_main].reshape(rows_main, LANES)    # pure bitcast when n_main == n
        t2 = t[:n_main].reshape(rows_main, LANES)

        acc = _build_dice_sums(block_rows, nb_total, n_cores)(x2, t2)
        acc = acc.reshape(n_cores, 2, block_rows, LANES)
        part = jnp.sum(acc, axis=(0, 2, 3))          # one tiny final reduction in XLA
        intersection, denom = part[0], part[1]
    else:
        # Too small for even one (8,128) block: nothing for the kernel to do.
        n_main = 0
        intersection = jnp.float32(0.0)
        denom = jnp.float32(0.0)

    if n_main < n:
        # Ragged tail (a few rows at most): plain JAX on a small slice instead of padding
        # and re-streaming the whole array.
        xt = x[n_main:].astype(jnp.float32)
        tt = t[n_main:].astype(jnp.float32)
        pt = jax.nn.sigmoid(xt)
        intersection = intersection + jnp.sum(pt * tt)
        denom = denom + jnp.sum(pt) + jnp.sum(tt)

    dice = (2.0 * intersection + smooth) / (denom + smooth)
    return 1.0 - dice


def _dice_loss_ref(inputs, targets, smooth: float = 1.0):
    p = jax.nn.sigmoid(inputs.astype(jnp.float32)).reshape(-1)
    t = targets.astype(jnp.float32).reshape(-1)
    inter = jnp.sum(p * t)
    dice = (2.0 * inter + smooth) / (jnp.sum(p) + jnp.sum(t) + smooth)
    return 1.0 - dice


if __name__ == "__main__":
    key = jax.random.PRNGKey(0)
    k1, k2 = jax.random.split(key)

    # Small NCHW segmentation-style inputs: logits + binary targets.
    x = jax.random.normal(k1, (2, 4, 16, 16), dtype=jnp.float32)
    t = jax.random.bernoulli(k2, 0.5, (2, 4, 16, 16)).astype(jnp.float32)

    loss = dice_loss(x, t, smooth=1.0)
    loss = jax.block_until_ready(loss)

    ref = _dice_loss_ref(x, t, smooth=1.0)
    assert jnp.allclose(loss, ref, rtol=1e-5, atol=1e-5), (loss, ref)

    print("KERNEL_OK")
</pallas_src>

<mosaic_0001>
module attributes {stable_mosaic.version = 11 : i64} {
  func.func @kernel(%arg0: i32, %arg1: i32, %arg2: memref<16x128xf32, #tpu.memory_space<vmem>>, %arg3: memref<16x128xf32, #tpu.memory_space<vmem>>, %arg4: memref<2x16x128xf32, #tpu.memory_space<vmem>>) attributes {dimension_semantics = [#tpu.dimension_semantics<parallel>, #tpu.dimension_semantics<arbitrary>], iteration_bounds = array<i64: 1, 1>, scalar_prefetch = 0 : i64, scratch_operands = 0 : i64, tpu.core_type = #tpu.core_type<tc>, window_params = [{transform_indices = @transform_0, window_bounds = array<i64: 16, 128>}, {transform_indices = @transform_1, window_bounds = array<i64: 16, 128>}, {transform_indices = @transform_2, window_bounds = array<i64: 2, 16, 128>}]} {
    %c0_i32 = arith.constant 0 : i32
    %0 = arith.cmpi eq, %arg1, %c0_i32 : i32
    %1 = arith.extui %0 : i1 to i32
    %c0_i32_0 = arith.constant 0 : i32
    %2 = arith.cmpi ne, %1, %c0_i32_0 : i32
    scf.if %2 {
      %cst_15 = arith.constant 0.000000e+00 : f32
      %24 = vector.broadcast %cst_15 : f32 to vector<2x16x128xf32>
      %c0_16 = arith.constant 0 : index
      %c0_17 = arith.constant 0 : index
      %c0_18 = arith.constant 0 : index
      %25 = vector.load %arg4[%c0_16, %c0_17, %c0_18] : memref<2x16x128xf32, #tpu.memory_space<vmem>>, vector<2x16x128xf32>
      tpu.vector_store %arg4[%c0_16, %c0_17, %c0_18], %24 {strides = array<i32>} : memref<2x16x128xf32, #tpu.memory_space<vmem>>, vector<2x16x128xf32>,
    } else {
    }
    %c0 = arith.constant 0 : index
    %c0_1 = arith.constant 0 : index
    %3 = vector.load %arg2[%c0, %c0_1] : memref<16x128xf32, #tpu.memory_space<vmem>>, vector<16x128xf32>
    %c0_2 = arith.constant 0 : index
    %c0_3 = arith.constant 0 : index
    %4 = vector.load %arg3[%c0_2, %c0_3] : memref<16x128xf32, #tpu.memory_space<vmem>>, vector<16x128xf32>
    %5 = arith.negf %3 : vector<16x128xf32>
    %6 = math.exp %5 : vector<16x128xf32>
    %cst = arith.constant 1.000000e+00 : f32
    %7 = vector.broadcast %cst : f32 to vector<16x128xf32>
    %8 = arith.addf %7, %6 : vector<16x128xf32>
    %9 = arith.divf %7, %8 : vector<16x128xf32>
    %c0_4 = arith.constant 0 : index
    %c0_5 = arith.constant 0 : index
    %c0_6 = arith.constant 0 : index
    %10 = vector.load %arg4[%c0_4, %c0_5, %c0_6] : memref<2x16x128xf32, #tpu.memory_space<vmem>>, vector<1x16x128xf32>
    %11 = vector.shape_cast %10 : vector<1x16x128xf32> to vector<16x128xf32>
    %12 = arith.mulf %9, %4 : vector<16x128xf32>
    %13 = arith.addf %11, %12 : vector<16x128xf32>
    %c0_7 = arith.constant 0 : index
    %c0_8 = arith.constant 0 : index
    %c0_9 = arith.constant 0 : index
    %14 = vector.load %arg4[%c0_7, %c0_8, %c0_9] : memref<2x16x128xf32, #tpu.memory_space<vmem>>, vector<1x16x128xf32>
    %15 = vector.shape_cast %14 : vector<1x16x128xf32> to vector<16x128xf32>
    %16 = vector.shape_cast %13 : vector<16x128xf32> to vector<1x16x128xf32>
    tpu.vector_store %arg4[%c0_7, %c0_8, %c0_9], %16 {strides = array<i32>} : memref<2x16x128xf32, #tpu.memory_space<vmem>>, vector<1x16x128xf32>,
    %c1 = arith.constant 1 : index
    %c0_10 = arith.constant 0 : index
    %c0_11 = arith.constant 0 : index
    %17 = vector.load %arg4[%c1, %c0_10, %c0_11] : memref<2x16x128xf32, #tpu.memory_space<vmem>>, vector<1x16x128xf32>
    %18 = vector.shape_cast %17 : vector<1x16x128xf32> to vector<16x128xf32>
    %19 = arith.addf %9, %4 : vector<16x128xf32>
    %20 = arith.addf %18, %19 : vector<16x128xf32>
    %c1_12 = arith.constant 1 : index
    %c0_13 = arith.constant 0 : index
    %c0_14 = arith.constant 0 : index
    %21 = vector.load %arg4[%c1_12, %c0_13, %c0_14] : memref<2x16x128xf32, #tpu.memory_space<vmem>>, vector<1x16x128xf32>
    %22 = vector.shape_cast %21 : vector<1x16x128xf32> to vector<16x128xf32>
    %23 = vector.shape_cast %20 : vector<16x128xf32> to vector<1x16x128xf32>
    tpu.vector_store %arg4[%c1_12, %c0_13, %c0_14], %23 {strides = array<i32>} : memref<2x16x128xf32, #tpu.memory_space<vmem>>, vector<1x16x128xf32>,
    return
  }
  func.func @transform_0(%arg0: i32, %arg1: i32) -> (i32, i32) {
    %c1_i32 = arith.constant 1 : i32
    %0 = arith.muli %arg0, %c1_i32 : i32
    %1 = arith.addi %0, %arg1 : i32
    %c0_i32 = arith.constant 0 : i32
    %c0_i32_0 = arith.constant 0 : i32
    return %1, %c0_i32 : i32, i32
  }
  func.func @transform_1(%arg0: i32, %arg1: i32) -> (i32, i32) {
    %c1_i32 = arith.constant 1 : i32
    %0 = arith.muli %arg0, %c1_i32 : i32
    %1 = arith.addi %0, %arg1 : i32
    %c0_i32 = arith.constant 0 : i32
    %c0_i32_0 = arith.constant 0 : i32
    return %1, %c0_i32 : i32, i32
  }
  func.func @transform_2(%arg0: i32, %arg1: i32) -> (i32, i32, i32) {
    %c0_i32 = arith.constant 0 : i32
    %c0_i32_0 = arith.constant 0 : i32
    %c0_i32_1 = arith.constant 0 : i32
    return %arg0, %c0_i32, %c0_i32_0 : i32, i32, i32
  }
}

</mosaic_0001>

<llo_original>
// kernel: dice_loss.1
$region0: #{dice_loss.1}
  #allocation0 [shape = 'u32[]', space=smem, size = 0x4, offset = 0x4, fixed_abs, tag = 'smem constant byte address 0x4 - core index']
  #allocation1 [shape = 'u32[144,128]{1,0:T(1,128)}', space=vmem, size = 0x12000, scoped, tag = 'internal scratch']
  %s0 = inlined_call_operand.vmem [shape: f32[16,128], index: 0, kind: input, shape index: {}]
  %s1 = inlined_call_operand.vmem [shape: f32[16,128], index: 1, kind: input, shape index: {}]
  %s2 = inlined_call_operand.vmem [shape: f32[2,16,128], index: 2, kind: output, shape index: {}]
  %s3 = sld [smem:[#allocation0]]
  $region22: #{dice_loss.1} parent=0
    _
  %s5 = ssub.s32 1, %s3
  %s6 = scalar_select 0, %s5, %s3
  // Predicated region
  $region2: #{dice_loss.1} parent=0 // pred_check
    _
  $region3: #{dice_loss.1} parent=0 // pred_check_branch
    %8 = sbr.rel (0) target = $region5
  $region4: #{dice_loss.1} parent=0 // pred_region
    %s9 = sadd.s32 0, 0
    %s10 = smul.u32 2, %s9
    %p11 = scmp.lt.s32.totalorder %s10, 1
    %s12 = scalar_select %p11, %s10, 1
    %s13 = smul.addr %s12, 8
    %s14 = scalar_lea.vmem %s0, %s13
    %s15 = sadd.s32 0, 0
    %s16 = smul.u32 2, %s15
  $region5: #{dice_loss.1} parent=0 // pred_fallthru
    _
  // Predicated region
  $region6: #{dice_loss.1} parent=0 // pred_check
    _
  $region7: #{dice_loss.1} parent=0 // pred_check_branch
    %18 = sbr.rel (0) target = $region9
  $region8: #{dice_loss.1} parent=0 // pred_region
    %s19 = sadd.s32 0, 0
    %s20 = smul.u32 2, %s19
    %p21 = scmp.lt.s32.totalorder %s20, 1
    %s22 = scalar_select %p21, %s20, 1
    %s23 = smul.addr %s22, 8
    %s24 = scalar_lea.vmem %s1, %s23
    %s25 = sadd.s32 0, 0
    %s26 = smul.u32 2, %s25
  $region9: #{dice_loss.1} parent=0 // pred_fallthru
    _
  %s27 = sadd.s32 0, 0
  %s28 = smul.u32 2, %s27
  %p29 = scmp.lt.s32.totalorder %s28, 1
  %s30 = scalar_select %p29, %s28, 1
  %s31 = smul.addr %s30, 8
  %s32 = scalar_lea.vmem %s0, %s31
  %s33 = sadd.s32 0, 0
  %s34 = smul.u32 2, %s33
  %p35 = scmp.lt.s32.totalorder %s34, 1
  %s36 = scalar_select %p35, %s34, 1
  %s37 = smul.addr %s36, 8
  %s38 = scalar_lea.vmem %s1, %s37
  %s39 = sadd.s32 0, 0
  %s40 = smul.u32 2, %s39
  %p41 = scmp.lt.s32.totalorder %s40, 1
  %s42 = scalar_select %p41, %s40, 1
  %s43 = smul.addr %s42, 8
  %s44 = scalar_lea.vmem %s0, %s43
  %s45 = sadd.s32 0, 0
  %s46 = smul.u32 2, %s45
  %s47 = sadd.s32 0, 0
  %s48 = smul.u32 2, %s47
  %p49 = scmp.lt.s32.totalorder %s48, 1
  %s50 = scalar_select %p49, %s48, 1
  %s51 = smul.addr %s50, 8
  %s52 = scalar_lea.vmem %s1, %s51
  %s53 = sadd.s32 0, 0
  %s54 = smul.u32 2, %s53
  %p55 = scmp.eq.s32.totalorder 0, 0
  // Predicated region
  $region10: #{dice_loss.1} parent=0 // pred_check
    %p56 = pneg %p55
  $region11: #{dice_loss.1} parent=0 // pred_check_branch
    %58 = sbr.rel (%p56) target = $region13
  $region12: #{dice_loss.1} parent=0 // pred_region
    %59 = vst [vmem:[%s2] sm:$0xff] 0.0
    %60 = vst [vmem:[%s2 + $0x8] sm:$0xff] 0.0
    %61 = vst [vmem:[%s2 + $0x10] sm:$0xff] 0.0
    %62 = vst [vmem:[%s2 + $0x18] sm:$0xff] 0.0
  $region13: #{dice_loss.1} parent=0 // pred_fallthru
    _
  %v63 = vld [vmem:[%s44] sm:$0xff]
  %v64 = vld [vmem:[%s44 + $0x8] sm:$0xff]
  %v65 = vld [vmem:[%s52] sm:$0xff]
  %v66 = vld [vmem:[%s52 + $0x8] sm:$0xff]
  %v67 = vxor.u32 %v63, 2147483648
  %v68 = vxor.u32 %v64, 2147483648
  %v69 = vmul.f32 %v67, 1.442695
  %v70 = vpow.pop %v69
  %v71 = vmul.f32 %v68, 1.442695
  %v72 = vpow.pop %v71
  %v73 = vadd.f32 %v70, 1.0
  %v74 = vadd.f32 %v72, 1.0
  %v75 = vrcp.pop %v73
  %v76 = vmul.f32 1.0, %v75
  %v77 = vrcp.pop %v74
  %v78 = vmul.f32 1.0, %v77
  %v79 = vld [vmem:[%s2] sm:$0xff]
  %v80 = vld [vmem:[%s2 + $0x8] sm:$0xff]
  %v81 = vmul.f32 %v76, %v65
  %v82 = vmul.f32 %v78, %v66
  %v83 = vadd.f32 %v79, %v81
  %v84 = vadd.f32 %v80, %v82
  %85 = vst [vmem:[%s2] sm:$0xff] %v83
  %86 = vst [vmem:[%s2 + $0x8] sm:$0xff] %v84
  %s87 = scalar_lea.vmem %s2, 16
  %v88 = vld [vmem:[%s87] sm:$0xff]
  %v89 = vld [vmem:[%s87 + $0x8] sm:$0xff]
  %v90 = vadd.f32 %v76, %v65
  %v91 = vadd.f32 %v78, %v66
  %v92 = vadd.f32 %v88, %v90
  %v93 = vadd.f32 %v89, %v91
  %94 = vst [vmem:[%s87] sm:$0xff] %v92
  %95 = vst [vmem:[%s87 + $0x8] sm:$0xff] %v93
  // Predicated region
  $region14: #{dice_loss.1} parent=0 // pred_check
    _
  $region15: #{dice_loss.1} parent=0 // pred_check_branch
    %97 = sbr.rel (0) target = $region17
  $region16: #{dice_loss.1} parent=0 // pred_region
    _
  $region17: #{dice_loss.1} parent=0 // pred_fallthru
    _
  // Predicated region
  $region18: #{dice_loss.1} parent=0 // pred_check
    _
  $region19: #{dice_loss.1} parent=0 // pred_check_branch
    %99 = sbr.rel (0) target = $region21
  $region20: #{dice_loss.1} parent=0 // pred_region
    _
  $region21: #{dice_loss.1} parent=0 // pred_fallthru
    _

</llo_original>
